<compile_context>
chip_gen: v7x
topology: tpu7x:2x2x1
jax: 0.10.0
libtpu: 0.0.40
codegen_flags: <defaults>
</compile_context>

<pallas_src>
import functools

import jax
import jax.numpy as jnp
from jax.experimental import pallas as pl
from jax.experimental.pallas import tpu as pltpu


def _esgnn_fwd_kernel(hT_ref, adjT_ref, wfcT_ref, bfc_ref, wclaT_ref, bcla_ref,
                      bgate_ref, *rest,
                      layer_num, iter_lowpass, re_eps, ir_eps, dim):
    D = dim
    f32 = jnp.float32
    wgate_refs = rest[:layer_num]
    relog_ref, irlog_ref, rez_ref, irz_ref, cat_scr = rest[layer_num:]

    adjT = adjT_ref[...]                               # [N, N], adjT[u, v] = 1 iff u -> v
    rs_adj = jnp.sum(adjT, axis=0, keepdims=True)      # [1, N] in-degree of each dst v

    # Fused re_fc | ir_fc (+ ReLU): catT rows 0..D-1 = re_h^T, rows D..2D-1 = ir_h^T.
    catT = jnp.dot(wfcT_ref[...], hT_ref[...], preferred_element_type=f32)
    catT = jnp.maximum(catT + bfc_ref[...], 0.0)       # [2D, N]
    cat_scr[...] = catT
    raw_re = catT[:D, :]                               # residual sources (fixed per model)
    raw_ir = catT[D:, :]

    for l in range(layer_num):
        catT = cat_scr[...]
        bg = bgate_ref[l]                              # scalar gate bias (SMEM)

        # sub_gate(cat([h_dst, h_src])) decomposed per node, fused into ONE matmul:
        # proj[0, v] = <w_dst, h[v]>,  proj[1, u] = <w_src, h[u]>.
        proj = jnp.dot(wgate_refs[l][...], catT, preferred_element_type=f32)  # [2, N]
        dst_row = proj[0:1, :]                         # [1, N]  (dst index = lane axis v)
        src_col = jnp.transpose(proj[1:2, :])          # [N, 1]  (src index = sublane axis u)

        # Adjacency-masked edge scores: asT[u, v] = adj * tanh(dst[v] + src[u] + b).
        # This is the only N^2 f32 temporary that has to live alongside adjT.
        asT = adjT * jnp.tanh(dst_row + src_col + bg)  # [N, N]

        # norm_disentangling:  sum_u re_s[u->v] = 0.5 * (indeg[v] + sum_u asT[u, v])
        rs_as = jnp.sum(asT, axis=0, keepdims=True)    # [1, N]
        re_norm = jax.lax.rsqrt(jnp.maximum(0.5 * (rs_adj + rs_as), 1.0))  # [1, N]
        ir_norm = jax.lax.rsqrt(jnp.maximum(0.5 * (rs_adj - rs_as), 1.0))  # [1, N]

        # Low-pass propagation in transposed layout:
        #   h_new^T = ((h^T * n) @ M) * n,   M[u, v] = branch edge score of u -> v.
        # Norms are applied to the [D, N] features (node axis = lanes), so they are
        # never transposed; M is cast to bf16 for the MXU, accumulation stays f32.
        m_re = (0.5 * (adjT + asT)).astype(jnp.bfloat16)
        x = catT[:D, :]
        for _ in range(iter_lowpass):
            x = jnp.dot((x * re_norm).astype(jnp.bfloat16), m_re,
                        preferred_element_type=f32) * re_norm
        re_next = re_eps * raw_re + x                  # residual fused in

        m_ir = (0.5 * (adjT - asT)).astype(jnp.bfloat16)
        x = catT[D:, :]
        for _ in range(iter_lowpass):
            x = jnp.dot((x * ir_norm).astype(jnp.bfloat16), m_ir,
                        preferred_element_type=f32) * ir_norm
        ir_next = ir_eps * raw_ir + x

        cat_scr[:D, :] = re_next
        cat_scr[D:, :] = ir_next

    # Classifier heads (shared cla weights), still in [feat, N] layout.
    catT = cat_scr[...]
    re_z = catT[:D, :]
    ir_z = catT[D:, :]
    rez_ref[...] = re_z
    irz_ref[...] = ir_z
    wcla = wclaT_ref[...]
    bcla = bcla_ref[...]
    relog_ref[...] = jnp.dot(wcla, re_z, preferred_element_type=f32) + bcla
    irlog_ref[...] = jnp.dot(wcla, ir_z, preferred_element_type=f32) + bcla


def esgnn_forward_pallas(h, adj_src_dst, params, *, layer_num, iter_lowpass,
                         re_eps, ir_eps):
    """h: [N, IN]; adj_src_dst[u, v] = 1.0 iff there is an edge u -> v."""
    (w_re, b_re, w_ir, b_ir, w_cla, b_cla, gate_ws, gate_bs) = params
    N, _ = h.shape
    D = w_re.shape[0]
    out_dim = w_cla.shape[0]

    # Layout plumbing done in the (jitted) wrapper: node axis -> lane axis.
    hT = jnp.transpose(h)                                        # [IN, N]
    wfcT = jnp.concatenate([w_re, w_ir], axis=0)                 # [2D, IN] (PyTorch [out,in])
    bfc = jnp.concatenate([b_re, b_ir]).reshape(2 * D, 1)        # [2D, 1]
    bclac = b_cla.reshape(out_dim, 1)                            # [OUT, 1]
    wgates = [w.reshape(2, 2 * D) for w in gate_ws]              # rows: [w_dst ; w_src]
    bgates = jnp.stack([b.reshape(()) for b in gate_bs]).astype(jnp.float32)  # [L]

    vmem = pl.BlockSpec(memory_space=pltpu.MemorySpace.VMEM)
    smem = pl.BlockSpec(memory_space=pltpu.MemorySpace.SMEM)
    kernel = functools.partial(_esgnn_fwd_kernel, layer_num=layer_num,
                               iter_lowpass=iter_lowpass,
                               re_eps=re_eps, ir_eps=ir_eps, dim=D)

    # TODO(synk): for large N, tile destination-node blocks with a grid
    # (dimension_semantics=("parallel",)) plus a norm pre-pass so per-step VMEM is
    # O(block*N) instead of N^2; the reference size fits one VMEM-resident call.
    relogT, irlogT, rezT, irzT = pl.pallas_call(
        kernel,
        out_shape=(jax.ShapeDtypeStruct((out_dim, N), jnp.float32),
                   jax.ShapeDtypeStruct((out_dim, N), jnp.float32),
                   jax.ShapeDtypeStruct((D, N), jnp.float32),
                   jax.ShapeDtypeStruct((D, N), jnp.float32)),
        in_specs=[vmem] * 6 + [smem] + [vmem] * layer_num,
        out_specs=(vmem, vmem, vmem, vmem),
        scratch_shapes=[pltpu.VMEM((2 * D, N), jnp.float32)],
    )(hT, adj_src_dst, wfcT, bfc, w_cla, bclac, bgates, *wgates)

    return (jnp.transpose(relogT), jnp.transpose(irlogT),
            jnp.transpose(rezT), jnp.transpose(irzT))


if __name__ == "__main__":
    # Sizes consistent with ESGNN: branches use hidden_dim // 2 features.
    N = 16            # graph nodes
    IN_DIM = 8
    HIDDEN = 32       # hidden_dim
    D = HIDDEN // 2   # per-branch feature dim
    OUT_DIM = 4
    LAYER_NUM = 2
    ITER_LOWPASS = 1
    RE_EPS = 0.1
    IR_EPS = 0.1

    key = jax.random.PRNGKey(0)
    keys = jax.random.split(key, 8)

    h = jax.random.normal(keys[0], (N, IN_DIM), jnp.float32)

    # Deterministic random directed graph with self-loops; adj_src_dst[u, v] = 1 iff u -> v.
    adj_src_dst = (jax.random.uniform(keys[1], (N, N)) < 0.3).astype(jnp.float32)
    adj_src_dst = jnp.maximum(adj_src_dst, jnp.eye(N, dtype=jnp.float32))

    def linear_init(k, fan_in, fan_out):
        # PyTorch nn.Linear default init; weight stored [out, in].
        k1, k2 = jax.random.split(k)
        bound = 1.0 / float(fan_in) ** 0.5
        w = jax.random.uniform(k1, (fan_out, fan_in), jnp.float32, -bound, bound)
        b = jax.random.uniform(k2, (fan_out,), jnp.float32, -bound, bound)
        return w, b

    w_re, b_re = linear_init(keys[2], IN_DIM, D)         # re_fc
    w_ir, b_ir = linear_init(keys[3], IN_DIM, D)         # ir_fc
    w_cla, b_cla = linear_init(keys[4], D, OUT_DIM)      # cla

    gate_ws, gate_bs = [], []
    for i in range(LAYER_NUM):
        wg, bg = linear_init(keys[5 + i], 2 * HIDDEN, 1)  # sub_gate: Linear(2*hidden, 1)
        gate_ws.append(wg)                                # [1, 4D]
        gate_bs.append(bg)                                # [1]

    params = (w_re, b_re, w_ir, b_ir, w_cla, b_cla, gate_ws, gate_bs)

    fwd = jax.jit(functools.partial(
        esgnn_forward_pallas, layer_num=LAYER_NUM, iter_lowpass=ITER_LOWPASS,
        re_eps=RE_EPS, ir_eps=IR_EPS))

    out = fwd(h, adj_src_dst, params)
    jax.block_until_ready(out)

    # Pure-JAX reference (eval mode: dropout = identity) for a sanity check.
    def reference_forward(h, adj_sd):
        A = adj_sd.T                                      # A[v, u] = 1 iff u -> v
        re_h = jax.nn.relu(h @ w_re.T + b_re)
        ir_h = jax.nn.relu(h @ w_ir.T + b_ir)
        re_raw, ir_raw = re_h, ir_h
        for wg, bg in zip(gate_ws, gate_bs):
            cat = jnp.concatenate([re_h, ir_h], axis=1)   # [N, 2D]
            dst = cat @ wg[0, :2 * D]
            src = cat @ wg[0, 2 * D:]
            s = jnp.tanh(dst[:, None] + src[None, :] + bg[0])
            re_s = A * (1.0 + s) * 0.5
            ir_s = A * (1.0 - s) * 0.5
            re_n = jnp.maximum(re_s.sum(1), 1.0) ** -0.5
            ir_n = jnp.maximum(ir_s.sum(1), 1.0) ** -0.5
            re_e = re_s * re_n[:, None] * re_n[None, :]
            ir_e = ir_s * ir_n[:, None] * ir_n[None, :]
            re_x, ir_x = re_h, ir_h
            for _ in range(ITER_LOWPASS):
                re_x = re_e @ re_x
                ir_x = ir_e @ ir_x
            re_h = RE_EPS * re_raw + re_x
            ir_h = IR_EPS * ir_raw + ir_x
        return (re_h @ w_cla.T + b_cla, ir_h @ w_cla.T + b_cla, re_h, ir_h)

    ref = reference_forward(h, adj_src_dst)
    for got, want in zip(out, ref):
        assert jnp.allclose(got, want, rtol=1e-1, atol=1e-1), \
            float(jnp.max(jnp.abs(got - want)))

    print("KERNEL_OK")
</pallas_src>

<mosaic_0001>
module attributes {stable_mosaic.version = 11 : i64} {
  func.func @_esgnn_fwd_kernel(%arg0: memref<8x16xf32, #tpu.memory_space<vmem>>, %arg1: memref<16x16xf32, #tpu.memory_space<vmem>>, %arg2: memref<32x8xf32, #tpu.memory_space<vmem>>, %arg3: memref<32x1xf32, #tpu.memory_space<vmem>>, %arg4: memref<4x16xf32, #tpu.memory_space<vmem>>, %arg5: memref<4x1xf32, #tpu.memory_space<vmem>>, %arg6: memref<2xf32, #tpu.memory_space<smem>>, %arg7: memref<2x32xf32, #tpu.memory_space<vmem>>, %arg8: memref<2x32xf32, #tpu.memory_space<vmem>>, %arg9: memref<4x16xf32, #tpu.memory_space<vmem>>, %arg10: memref<4x16xf32, #tpu.memory_space<vmem>>, %arg11: memref<16x16xf32, #tpu.memory_space<vmem>>, %arg12: memref<16x16xf32, #tpu.memory_space<vmem>>, %arg13: memref<32x16xf32, #tpu.memory_space<vmem>>) attributes {dimension_semantics = [], scalar_prefetch = 0 : i64, scratch_operands = 1 : i64, tpu.core_type = #tpu.core_type<tc>} {
    %c0 = arith.constant 0 : index
    %c0_0 = arith.constant 0 : index
    %0 = vector.load %arg1[%c0, %c0_0] : memref<16x16xf32, #tpu.memory_space<vmem>>, vector<16x16xf32>
    %cst = arith.constant dense<0.000000e+00> : vector<16xf32>
    %1 = vector.multi_reduction <add>, %0, %cst [0] : vector<16x16xf32> to vector<16xf32>
    %2 = vector.shape_cast %1 : vector<16xf32> to vector<1x16xf32>
    %c0_1 = arith.constant 0 : index
    %c0_2 = arith.constant 0 : index
    %3 = vector.load %arg2[%c0_1, %c0_2] : memref<32x8xf32, #tpu.memory_space<vmem>>, vector<32x8xf32>
    %c0_3 = arith.constant 0 : index
    %c0_4 = arith.constant 0 : index
    %4 = vector.load %arg0[%c0_3, %c0_4] : memref<8x16xf32, #tpu.memory_space<vmem>>, vector<8x16xf32>
    %cst_5 = arith.constant dense<0.000000e+00> : vector<32x16xf32>
    %5 = tpu.matmul %3, %4, %cst_5 {dimension_numbers = #tpu.dot_dimension_numbers<[1], [0], [0], [1], [0, 0, 1, 1], [], []>} : vector<32x8xf32>, vector<8x16xf32>, vector<32x16xf32> -> vector<32x16xf32>
    %c0_6 = arith.constant 0 : index
    %c0_7 = arith.constant 0 : index
    %6 = vector.load %arg3[%c0_6, %c0_7] : memref<32x1xf32, #tpu.memory_space<vmem>>, vector<32x1xf32>
    %7 = vector.broadcast %6 : vector<32x1xf32> to vector<32x16xf32>
    %8 = arith.addf %5, %7 : vector<32x16xf32>
    %cst_8 = arith.constant 0.000000e+00 : f32
    %9 = vector.broadcast %cst_8 : f32 to vector<32x16xf32>
    %10 = arith.maximumf %8, %9 : vector<32x16xf32>
    %c0_9 = arith.constant 0 : index
    %c0_10 = arith.constant 0 : index
    %11 = vector.load %arg13[%c0_9, %c0_10] : memref<32x16xf32, #tpu.memory_space<vmem>>, vector<32x16xf32>
    tpu.vector_store %arg13[%c0_9, %c0_10], %10 {strides = array<i32>} : memref<32x16xf32, #tpu.memory_space<vmem>>, vector<32x16xf32>,
    %12 = vector.extract_strided_slice %10 {offsets = [0, 0], sizes = [16, 16], strides = [1, 1]} : vector<32x16xf32> to vector<16x16xf32>
    %13 = vector.extract_strided_slice %10 {offsets = [16, 0], sizes = [16, 16], strides = [1, 1]} : vector<32x16xf32> to vector<16x16xf32>
    %c0_11 = arith.constant 0 : index
    %c0_12 = arith.constant 0 : index
    %14 = vector.load %arg13[%c0_11, %c0_12] : memref<32x16xf32, #tpu.memory_space<vmem>>, vector<32x16xf32>
    %c0_13 = arith.constant 0 : index
    %15 = memref.load %arg6[%c0_13] : memref<2xf32, #tpu.memory_space<smem>>
    %c0_14 = arith.constant 0 : index
    %c0_15 = arith.constant 0 : index
    %16 = vector.load %arg7[%c0_14, %c0_15] : memref<2x32xf32, #tpu.memory_space<vmem>>, vector<2x32xf32>
    %cst_16 = arith.constant dense<0.000000e+00> : vector<2x16xf32>
    %17 = tpu.matmul %16, %14, %cst_16 {dimension_numbers = #tpu.dot_dimension_numbers<[1], [0], [0], [1], [0, 0, 1, 1], [], []>} : vector<2x32xf32>, vector<32x16xf32>, vector<2x16xf32> -> vector<2x16xf32>
    %18 = vector.extract_strided_slice %17 {offsets = [0, 0], sizes = [1, 16], strides = [1, 1]} : vector<2x16xf32> to vector<1x16xf32>
    %19 = vector.extract_strided_slice %17 {offsets = [1, 0], sizes = [1, 16], strides = [1, 1]} : vector<2x16xf32> to vector<1x16xf32>
    %20 = tpu.transpose %19, [1, 0] : vector<1x16xf32> -> vector<16x1xf32>
    %21 = vector.broadcast %18 : vector<1x16xf32> to vector<16x16xf32>
    %22 = vector.broadcast %20 : vector<16x1xf32> to vector<16x16xf32>
    %23 = arith.addf %21, %22 : vector<16x16xf32>
    %24 = vector.broadcast %15 : f32 to vector<16x16xf32>
    %25 = arith.addf %23, %24 : vector<16x16xf32>
    %26 = math.tanh %25 : vector<16x16xf32>
    %27 = arith.mulf %0, %26 : vector<16x16xf32>
    %cst_17 = arith.constant dense<0.000000e+00> : vector<16xf32>
    %28 = vector.multi_reduction <add>, %27, %cst_17 [0] : vector<16x16xf32> to vector<16xf32>
    %29 = vector.shape_cast %28 : vector<16xf32> to vector<1x16xf32>
    %30 = arith.addf %2, %29 : vector<1x16xf32>
    %cst_18 = arith.constant 5.000000e-01 : f32
    %31 = vector.broadcast %cst_18 : f32 to vector<1x16xf32>
    %32 = arith.mulf %31, %30 : vector<1x16xf32>
    %cst_19 = arith.constant 1.000000e+00 : f32
    %33 = vector.broadcast %cst_19 : f32 to vector<1x16xf32>
    %34 = arith.maximumf %32, %33 : vector<1x16xf32>
    %35 = math.rsqrt %34 : vector<1x16xf32>
    %36 = arith.subf %2, %29 : vector<1x16xf32>
    %cst_20 = arith.constant 5.000000e-01 : f32
    %37 = vector.broadcast %cst_20 : f32 to vector<1x16xf32>
    %38 = arith.mulf %37, %36 : vector<1x16xf32>
    %cst_21 = arith.constant 1.000000e+00 : f32
    %39 = vector.broadcast %cst_21 : f32 to vector<1x16xf32>
    %40 = arith.maximumf %38, %39 : vector<1x16xf32>
    %41 = math.rsqrt %40 : vector<1x16xf32>
    %42 = arith.addf %0, %27 : vector<16x16xf32>
    %cst_22 = arith.constant 5.000000e-01 : f32
    %43 = vector.broadcast %cst_22 : f32 to vector<16x16xf32>
    %44 = arith.mulf %43, %42 : vector<16x16xf32>
    %45 = arith.truncf %44 : vector<16x16xf32> to vector<16x16xbf16>
    %46 = vector.extract_strided_slice %14 {offsets = [0, 0], sizes = [16, 16], strides = [1, 1]} : vector<32x16xf32> to vector<16x16xf32>
    %47 = vector.broadcast %35 : vector<1x16xf32> to vector<16x16xf32>
    %48 = arith.mulf %46, %47 : vector<16x16xf32>
    %49 = arith.truncf %48 : vector<16x16xf32> to vector<16x16xbf16>
    %cst_23 = arith.constant dense<0.000000e+00> : vector<16x16xf32>
    %50 = tpu.matmul %49, %45, %cst_23 {dimension_numbers = #tpu.dot_dimension_numbers<[1], [0], [0], [1], [0, 0, 1, 1], [], []>} : vector<16x16xbf16>, vector<16x16xbf16>, vector<16x16xf32> -> vector<16x16xf32>
    %51 = vector.broadcast %35 : vector<1x16xf32> to vector<16x16xf32>
    %52 = arith.mulf %50, %51 : vector<16x16xf32>
    %cst_24 = arith.constant 1.000000e-01 : f32
    %53 = vector.broadcast %cst_24 : f32 to vector<16x16xf32>
    %54 = arith.mulf %53, %12 : vector<16x16xf32>
    %55 = arith.addf %54, %52 : vector<16x16xf32>
    %56 = arith.subf %0, %27 : vector<16x16xf32>
    %cst_25 = arith.constant 5.000000e-01 : f32
    %57 = vector.broadcast %cst_25 : f32 to vector<16x16xf32>
    %58 = arith.mulf %57, %56 : vector<16x16xf32>
    %59 = arith.truncf %58 : vector<16x16xf32> to vector<16x16xbf16>
    %60 = vector.extract_strided_slice %14 {offsets = [16, 0], sizes = [16, 16], strides = [1, 1]} : vector<32x16xf32> to vector<16x16xf32>
    %61 = vector.broadcast %41 : vector<1x16xf32> to vector<16x16xf32>
    %62 = arith.mulf %60, %61 : vector<16x16xf32>
    %63 = arith.truncf %62 : vector<16x16xf32> to vector<16x16xbf16>
    %cst_26 = arith.constant dense<0.000000e+00> : vector<16x16xf32>
    %64 = tpu.matmul %63, %59, %cst_26 {dimension_numbers = #tpu.dot_dimension_numbers<[1], [0], [0], [1], [0, 0, 1, 1], [], []>} : vector<16x16xbf16>, vector<16x16xbf16>, vector<16x16xf32> -> vector<16x16xf32>
    %65 = vector.broadcast %41 : vector<1x16xf32> to vector<16x16xf32>
    %66 = arith.mulf %64, %65 : vector<16x16xf32>
    %cst_27 = arith.constant 1.000000e-01 : f32
    %67 = vector.broadcast %cst_27 : f32 to vector<16x16xf32>
    %68 = arith.mulf %67, %13 : vector<16x16xf32>
    %69 = arith.addf %68, %66 : vector<16x16xf32>
    %c0_28 = arith.constant 0 : index
    %c0_29 = arith.constant 0 : index
    %70 = vector.load %arg13[%c0_28, %c0_29] : memref<32x16xf32, #tpu.memory_space<vmem>>, vector<16x16xf32>
    tpu.vector_store %arg13[%c0_28, %c0_29], %55 {strides = array<i32>} : memref<32x16xf32, #tpu.memory_space<vmem>>, vector<16x16xf32>,
    %c16 = arith.constant 16 : index
    %c0_30 = arith.constant 0 : index
    %71 = vector.load %arg13[%c16, %c0_30] : memref<32x16xf32, #tpu.memory_space<vmem>>, vector<16x16xf32>
    tpu.vector_store %arg13[%c16, %c0_30], %69 {strides = array<i32>} : memref<32x16xf32, #tpu.memory_space<vmem>>, vector<16x16xf32>,
    %c0_31 = arith.constant 0 : index
    %c0_32 = arith.constant 0 : index
    %72 = vector.load %arg13[%c0_31, %c0_32] : memref<32x16xf32, #tpu.memory_space<vmem>>, vector<32x16xf32>
    %c1 = arith.constant 1 : index
    %73 = memref.load %arg6[%c1] : memref<2xf32, #tpu.memory_space<smem>>
    %c0_33 = arith.constant 0 : index
    %c0_34 = arith.constant 0 : index
    %74 = vector.load %arg8[%c0_33, %c0_34] : memref<2x32xf32, #tpu.memory_space<vmem>>, vector<2x32xf32>
    %cst_35 = arith.constant dense<0.000000e+00> : vector<2x16xf32>
    %75 = tpu.matmul %74, %72, %cst_35 {dimension_numbers = #tpu.dot_dimension_numbers<[1], [0], [0], [1], [0, 0, 1, 1], [], []>} : vector<2x32xf32>, vector<32x16xf32>, vector<2x16xf32> -> vector<2x16xf32>
    %76 = vector.extract_strided_slice %75 {offsets = [0, 0], sizes = [1, 16], strides = [1, 1]} : vector<2x16xf32> to vector<1x16xf32>
    %77 = vector.extract_strided_slice %75 {offsets = [1, 0], sizes = [1, 16], strides = [1, 1]} : vector<2x16xf32> to vector<1x16xf32>
    %78 = tpu.transpose %77, [1, 0] : vector<1x16xf32> -> vector<16x1xf32>
    %79 = vector.broadcast %76 : vector<1x16xf32> to vector<16x16xf32>
    %80 = vector.broadcast %78 : vector<16x1xf32> to vector<16x16xf32>
    %81 = arith.addf %79, %80 : vector<16x16xf32>
    %82 = vector.broadcast %73 : f32 to vector<16x16xf32>
    %83 = arith.addf %81, %82 : vector<16x16xf32>
    %84 = math.tanh %83 : vector<16x16xf32>
    %85 = arith.mulf %0, %84 : vector<16x16xf32>
    %cst_36 = arith.constant dense<0.000000e+00> : vector<16xf32>
    %86 = vector.multi_reduction <add>, %85, %cst_36 [0] : vector<16x16xf32> to vector<16xf32>
    %87 = vector.shape_cast %86 : vector<16xf32> to vector<1x16xf32>
    %88 = arith.addf %2, %87 : vector<1x16xf32>
    %cst_37 = arith.constant 5.000000e-01 : f32
    %89 = vector.broadcast %cst_37 : f32 to vector<1x16xf32>
    %90 = arith.mulf %89, %88 : vector<1x16xf32>
    %cst_38 = arith.constant 1.000000e+00 : f32
    %91 = vector.broadcast %cst_38 : f32 to vector<1x16xf32>
    %92 = arith.maximumf %90, %91 : vector<1x16xf32>
    %93 = math.rsqrt %92 : vector<1x16xf32>
    %94 = arith.subf %2, %87 : vector<1x16xf32>
    %cst_39 = arith.constant 5.000000e-01 : f32
    %95 = vector.broadcast %cst_39 : f32 to vector<1x16xf32>
    %96 = arith.mulf %95, %94 : vector<1x16xf32>
    %cst_40 = arith.constant 1.000000e+00 : f32
    %97 = vector.broadcast %cst_40 : f32 to vector<1x16xf32>
    %98 = arith.maximumf %96, %97 : vector<1x16xf32>
    %99 = math.rsqrt %98 : vector<1x16xf32>
    %100 = arith.addf %0, %85 : vector<16x16xf32>
    %cst_41 = arith.constant 5.000000e-01 : f32
    %101 = vector.broadcast %cst_41 : f32 to vector<16x16xf32>
    %102 = arith.mulf %101, %100 : vector<16x16xf32>
    %103 = arith.truncf %102 : vector<16x16xf32> to vector<16x16xbf16>
    %104 = vector.extract_strided_slice %72 {offsets = [0, 0], sizes = [16, 16], strides = [1, 1]} : vector<32x16xf32> to vector<16x16xf32>
    %105 = vector.broadcast %93 : vector<1x16xf32> to vector<16x16xf32>
    %106 = arith.mulf %104, %105 : vector<16x16xf32>
    %107 = arith.truncf %106 : vector<16x16xf32> to vector<16x16xbf16>
    %cst_42 = arith.constant dense<0.000000e+00> : vector<16x16xf32>
    %108 = tpu.matmul %107, %103, %cst_42 {dimension_numbers = #tpu.dot_dimension_numbers<[1], [0], [0], [1], [0, 0, 1, 1], [], []>} : vector<16x16xbf16>, vector<16x16xbf16>, vector<16x16xf32> -> vector<16x16xf32>
    %109 = vector.broadcast %93 : vector<1x16xf32> to vector<16x16xf32>
    %110 = arith.mulf %108, %109 : vector<16x16xf32>
    %cst_43 = arith.constant 1.000000e-01 : f32
    %111 = vector.broadcast %cst_43 : f32 to vector<16x16xf32>
    %112 = arith.mulf %111, %12 : vector<16x16xf32>
    %113 = arith.addf %112, %110 : vector<16x16xf32>
    %114 = arith.subf %0, %85 : vector<16x16xf32>
    %cst_44 = arith.constant 5.000000e-01 : f32
    %115 = vector.broadcast %cst_44 : f32 to vector<16x16xf32>
    %116 = arith.mulf %115, %114 : vector<16x16xf32>
    %117 = arith.truncf %116 : vector<16x16xf32> to vector<16x16xbf16>
    %118 = vector.extract_strided_slice %72 {offsets = [16, 0], sizes = [16, 16], strides = [1, 1]} : vector<32x16xf32> to vector<16x16xf32>
    %119 = vector.broadcast %99 : vector<1x16xf32> to vector<16x16xf32>
    %120 = arith.mulf %118, %119 : vector<16x16xf32>
    %121 = arith.truncf %120 : vector<16x16xf32> to vector<16x16xbf16>
    %cst_45 = arith.constant dense<0.000000e+00> : vector<16x16xf32>
    %122 = tpu.matmul %121, %117, %cst_45 {dimension_numbers = #tpu.dot_dimension_numbers<[1], [0], [0], [1], [0, 0, 1, 1], [], []>} : vector<16x16xbf16>, vector<16x16xbf16>, vector<16x16xf32> -> vector<16x16xf32>
    %123 = vector.broadcast %99 : vector<1x16xf32> to vector<16x16xf32>
    %124 = arith.mulf %122, %123 : vector<16x16xf32>
    %cst_46 = arith.constant 1.000000e-01 : f32
    %125 = vector.broadcast %cst_46 : f32 to vector<16x16xf32>
    %126 = arith.mulf %125, %13 : vector<16x16xf32>
    %127 = arith.addf %126, %124 : vector<16x16xf32>
    %c0_47 = arith.constant 0 : index
    %c0_48 = arith.constant 0 : index
    %128 = vector.load %arg13[%c0_47, %c0_48] : memref<32x16xf32, #tpu.memory_space<vmem>>, vector<16x16xf32>
    tpu.vector_store %arg13[%c0_47, %c0_48], %113 {strides = array<i32>} : memref<32x16xf32, #tpu.memory_space<vmem>>, vector<16x16xf32>,
    %c16_49 = arith.constant 16 : index
    %c0_50 = arith.constant 0 : index
    %129 = vector.load %arg13[%c16_49, %c0_50] : memref<32x16xf32, #tpu.memory_space<vmem>>, vector<16x16xf32>
    tpu.vector_store %arg13[%c16_49, %c0_50], %127 {strides = array<i32>} : memref<32x16xf32, #tpu.memory_space<vmem>>, vector<16x16xf32>,
    %c0_51 = arith.constant 0 : index
    %c0_52 = arith.constant 0 : index
    %130 = vector.load %arg13[%c0_51, %c0_52] : memref<32x16xf32, #tpu.memory_space<vmem>>, vector<32x16xf32>
    %131 = vector.extract_strided_slice %130 {offsets = [0, 0], sizes = [16, 16], strides = [1, 1]} : vector<32x16xf32> to vector<16x16xf32>
    %132 = vector.extract_strided_slice %130 {offsets = [16, 0], sizes = [16, 16], strides = [1, 1]} : vector<32x16xf32> to vector<16x16xf32>
    %c0_53 = arith.constant 0 : index
    %c0_54 = arith.constant 0 : index
    %133 = vector.load %arg11[%c0_53, %c0_54] : memref<16x16xf32, #tpu.memory_space<vmem>>, vector<16x16xf32>
    tpu.vector_store %arg11[%c0_53, %c0_54], %131 {strides = array<i32>} : memref<16x16xf32, #tpu.memory_space<vmem>>, vector<16x16xf32>,
    %c0_55 = arith.constant 0 : index
    %c0_56 = arith.constant 0 : index
    %134 = vector.load %arg12[%c0_55, %c0_56] : memref<16x16xf32, #tpu.memory_space<vmem>>, vector<16x16xf32>
    tpu.vector_store %arg12[%c0_55, %c0_56], %132 {strides = array<i32>} : memref<16x16xf32, #tpu.memory_space<vmem>>, vector<16x16xf32>,
    %c0_57 = arith.constant 0 : index
    %c0_58 = arith.constant 0 : index
    %135 = vector.load %arg4[%c0_57, %c0_58] : memref<4x16xf32, #tpu.memory_space<vmem>>, vector<4x16xf32>
    %c0_59 = arith.constant 0 : index
    %c0_60 = arith.constant 0 : index
    %136 = vector.load %arg5[%c0_59, %c0_60] : memref<4x1xf32, #tpu.memory_space<vmem>>, vector<4x1xf32>
    %cst_61 = arith.constant dense<0.000000e+00> : vector<4x16xf32>
    %137 = tpu.matmul %135, %131, %cst_61 {dimension_numbers = #tpu.dot_dimension_numbers<[1], [0], [0], [1], [0, 0, 1, 1], [], []>} : vector<4x16xf32>, vector<16x16xf32>, vector<4x16xf32> -> vector<4x16xf32>
    %138 = vector.broadcast %136 : vector<4x1xf32> to vector<4x16xf32>
    %139 = arith.addf %137, %138 : vector<4x16xf32>
    %c0_62 = arith.constant 0 : index
    %c0_63 = arith.constant 0 : index
    %140 = vector.load %arg9[%c0_62, %c0_63] : memref<4x16xf32, #tpu.memory_space<vmem>>, vector<4x16xf32>
    tpu.vector_store %arg9[%c0_62, %c0_63], %139 {strides = array<i32>} : memref<4x16xf32, #tpu.memory_space<vmem>>, vector<4x16xf32>,
    %cst_64 = arith.constant dense<0.000000e+00> : vector<4x16xf32>
    %141 = tpu.matmul %135, %132, %cst_64 {dimension_numbers = #tpu.dot_dimension_numbers<[1], [0], [0], [1], [0, 0, 1, 1], [], []>} : vector<4x16xf32>, vector<16x16xf32>, vector<4x16xf32> -> vector<4x16xf32>
    %142 = vector.broadcast %136 : vector<4x1xf32> to vector<4x16xf32>
    %143 = arith.addf %141, %142 : vector<4x16xf32>
    %c0_65 = arith.constant 0 : index
    %c0_66 = arith.constant 0 : index
    %144 = vector.load %arg10[%c0_65, %c0_66] : memref<4x16xf32, #tpu.memory_space<vmem>>, vector<4x16xf32>
    tpu.vector_store %arg10[%c0_65, %c0_66], %143 {strides = array<i32>} : memref<4x16xf32, #tpu.memory_space<vmem>>, vector<4x16xf32>,
    return
  }
}

</mosaic_0001>

<llo_original>
// kernel: esgnn_forward_pallas.1
$region0: #{esgnn_forward_pallas.1}
  #allocation0 [shape = 'u32[]', space=smem, size = 0x4, offset = 0x4, fixed_abs, tag = 'smem constant byte address 0x4 - core index']
  #allocation1 [shape = 'u32[144,128]{1,0:T(1,128)}', space=vmem, size = 0x12000, scoped, tag = 'internal scratch']
  #allocation2 [shape = 'f32[32,16]{1,0:T(8,128)}', space=vmem, size = 0x4000, scoped, tag = 'scratch operand']
  %s0 = inlined_call_operand.vmem [shape: f32[8,16], index: 0, kind: input, shape index: {}]
  %s1 = inlined_call_operand.vmem [shape: f32[16,16], index: 1, kind: input, shape index: {}]
  %s2 = inlined_call_operand.vmem [shape: f32[32,8], index: 2, kind: input, shape index: {}]
  %s3 = inlined_call_operand.vmem [shape: f32[32,1], index: 3, kind: input, shape index: {}]
  %s4 = inlined_call_operand.vmem [shape: f32[4,16], index: 4, kind: input, shape index: {}]
  %s5 = inlined_call_operand.vmem [shape: f32[4,1], index: 5, kind: input, shape index: {}]
  %s6 = inlined_call_operand.vmem [shape: f32[2], index: 6, kind: input, shape index: {}]
  %s7 = inlined_call_operand.vmem [shape: f32[2,32], index: 7, kind: input, shape index: {}]
  %s8 = inlined_call_operand.vmem [shape: f32[2,32], index: 8, kind: input, shape index: {}]
  %s9 = inlined_call_operand.hbm [shape: f32[4,16], index: 9, kind: output, shape index: {0}]
  %s10 = inlined_call_operand.hbm [shape: f32[4,16], index: 10, kind: output, shape index: {1}]
  %s11 = inlined_call_operand.vmem [shape: f32[16,16], index: 11, kind: output, shape index: {2}]
  %s12 = inlined_call_operand.vmem [shape: f32[16,16], index: 12, kind: output, shape index: {3}]
  %13 = xla_tuple %s9, %s10, %s11, %s12
  %s14 = sld [smem:[#allocation0]]
  $region74: #{esgnn_forward_pallas.1} parent=0
    _
  %s16 = ssub.s32 1, %s14
  %s17 = scalar_select 0, %s16, %s14
  $region1: #{esgnn_forward_pallas.1} parent=0
    #allocation3 [shape = 'u8[512]{0}', space=smem, size = 0x200, scoped, tag = 'input window, operand 6, single buffered']
    #allocation4 [shape = 's32[1]{0}', space=sflag, size = 0x4, scoped, tag = 'scoped memory for esgnn_forward_pallas.1']
    #allocation5 [shape = 's32[1]{0}', space=sflag, size = 0x4, scoped, tag = 'scoped memory for esgnn_forward_pallas.1']
    #allocation6 [shape = 'u8[2048]{0}', space=vmem, size = 0x800, scoped, tag = 'output window, operand 0, single buffered']
    #allocation7 [shape = 'u8[2048]{0}', space=vmem, size = 0x800, scoped, tag = 'output window, operand 1, single buffered']
    #allocation8 [shape = 's32[1]{0}', space=sflag, size = 0x4, scoped, tag = 'scoped memory for esgnn_forward_pallas.1']
    %18 = vsyncpa [#allocation5], 0
    %19 = vsyncpa [#allocation4], 0
    %20 = vsyncpa [#allocation8], 0
    // Predicated region
    $region2: #{esgnn_forward_pallas.1} parent=1 // pred_check
      _
    $region3: #{esgnn_forward_pallas.1} parent=1 // pred_check_branch
      %22 = sbr.rel (0) target = $region5
    $region4: #{esgnn_forward_pallas.1} parent=1 // pred_region
      _
    $region5: #{esgnn_forward_pallas.1} parent=1 // pred_fallthru
      _
    // Predicated region
    $region6: #{esgnn_forward_pallas.1} parent=1 // pred_check
      _
    $region7: #{esgnn_forward_pallas.1} parent=1 // pred_check_branch
      %24 = sbr.rel (0) target = $region9
    $region8: #{esgnn_forward_pallas.1} parent=1 // pred_region
      _
    $region9: #{esgnn_forward_pallas.1} parent=1 // pred_fallthru
      _
    // Predicated region
    $region10: #{esgnn_forward_pallas.1} parent=1 // pred_check
      _
    $region11: #{esgnn_forward_pallas.1} parent=1 // pred_check_branch
      %26 = sbr.rel (0) target = $region13
    $region12: #{esgnn_forward_pallas.1} parent=1 // pred_region
      _
    $region13: #{esgnn_forward_pallas.1} parent=1 // pred_fallthru
      _
    // Predicated region
    $region14: #{esgnn_forward_pallas.1} parent=1 // pred_check
      _
    $region15: #{esgnn_forward_pallas.1} parent=1 // pred_check_branch
      %28 = sbr.rel (0) target = $region17
    $region16: #{esgnn_forward_pallas.1} parent=1 // pred_region
      _
    $region17: #{esgnn_forward_pallas.1} parent=1 // pred_fallthru
      _
    // Predicated region
    $region18: #{esgnn_forward_pallas.1} parent=1 // pred_check
      _
    $region19: #{esgnn_forward_pallas.1} parent=1 // pred_check_branch
      %30 = sbr.rel (0) target = $region21
    $region20: #{esgnn_forward_pallas.1} parent=1 // pred_region
      _
    $region21: #{esgnn_forward_pallas.1} parent=1 // pred_fallthru
      _
    // Predicated region
    $region22: #{esgnn_forward_pallas.1} parent=1 // pred_check
      _
    $region23: #{esgnn_forward_pallas.1} parent=1 // pred_check_branch
      %32 = sbr.rel (0) target = $region25
    $region24: #{esgnn_forward_pallas.1} parent=1 // pred_region
      _
    $region25: #{esgnn_forward_pallas.1} parent=1 // pred_fallthru
      _
    // Predicated region
    $region26: #{esgnn_forward_pallas.1} parent=1 // pred_check
      _
    $region27: #{esgnn_forward_pallas.1} parent=1 // pred_check_branch
      %34 = sbr.rel (0) target = $region29
    $region28: #{esgnn_forward_pallas.1} parent=1 // pred_region
      %s36 = ssub.s32 16, 16
      %37 = vsyncadd [#allocation5], %s36
      %s39 = sshll.u32 %s6, 4
      %s40 = int_to_ptr.vmem [resolvable:$true] %s39
      %42 = dma.vmem_to_smem %s40, 16, [#allocation3], [#allocation5]
    $region29: #{esgnn_forward_pallas.1} parent=1 // pred_fallthru
      _
    // Predicated region
    $region30: #{esgnn_forward_pallas.1} parent=1 // pred_check
      _
    $region31: #{esgnn_forward_pallas.1} parent=1 // pred_check_branch
      %44 = sbr.rel (0) target = $region33
    $region32: #{esgnn_forward_pallas.1} parent=1 // pred_region
      _
    $region33: #{esgnn_forward_pallas.1} parent=1 // pred_fallthru
      _
    // Predicated region
    $region34: #{esgnn_forward_pallas.1} parent=1 // pred_check
      _
    $region35: #{esgnn_forward_pallas.1} parent=1 // pred_check_branch
      %46 = sbr.rel (0) target = $region37
    $region36: #{esgnn_forward_pallas.1} parent=1 // pred_region
      _
    $region37: #{esgnn_forward_pallas.1} parent=1 // pred_fallthru
      _
    // Predicated region
    $region38: #{esgnn_forward_pallas.1} parent=1 // pred_check
      _
    $region39: #{esgnn_forward_pallas.1} parent=1 // pred_check_branch
      %48 = sbr.rel (0) target = $region41
    $region40: #{esgnn_forward_pallas.1} parent=1 // pred_region
      %49 = dma.done [#allocation5], 16
    $region41: #{esgnn_forward_pallas.1} parent=1 // pred_fallthru
      _
    %50 = sfence
    %v52 = vld [vmem:[%s1] sm:$0xff]
    %v53 = vld [vmem:[%s1 + $0x8] sm:$0xff]
    %vm54 = vcmask 130048
    %v55 = vsel %vm54, %v52, 0.0
    %v56 = vsel %vm54, %v53, 0.0
    %v57 = vadd.f32 %v55, %v56
    %v58 = vrot.slane %v57, 4
    %v59 = vadd.f32 %v57, %v58
    %v60 = vrot.slane %v59, 2
    %v61 = vadd.f32 %v59, %v60
    %v62 = vrot.slane %v61, 1
    %v63 = vadd.f32 %v61, %v62
    %v64 = vld [vmem:[%s2] sm:$0xff]
    %v65 = vld [vmem:[%s2 + $0x8] sm:$0xff]
    %v66 = vld [vmem:[%s2 + $0x10] sm:$0xff]
    %v67 = vld [vmem:[%s2 + $0x18] sm:$0xff]
    %v68 = vld [vmem:[%s0] sm:$0xff]
    %v69 = vld [vmem:[%s3] sm:$0xff]
    %v70 = vld [vmem:[%s3 + $0x8] sm:$0xff]
    %v71 = vld [vmem:[%s3 + $0x10] sm:$0xff]
    %v72 = vld [vmem:[%s3 + $0x18] sm:$0xff]
    %74 = vset.pattern.permute.xlu0 0
    %75 = vperm.xlu0 %74, %v69
    %v76 = vpop.permute.xlu0 %75
    %79 = vset.pattern.permute.xlu0 0
    %80 = vperm.xlu0 %79, %v70
    %v81 = vpop.permute.xlu0 %80
    %84 = vset.pattern.permute.xlu0 0
    %85 = vperm.xlu0 %84, %v71
    %v86 = vpop.permute.xlu0 %85
    %89 = vset.pattern.permute.xlu0 0
    %90 = vperm.xlu0 %89, %v72
    %v91 = vpop.permute.xlu0 %90
    %vm93 = vcmask 64512
    %v95 = vsel %vm93, %v64, 0
    %v98 = vsel %vm93, %v65, 0
    %v101 = vsel %vm93, %v66, 0
    %v104 = vsel %vm93, %v67, 0
    %106 = vmatprep.subr.mxu0 0.0
    %107 = vmatpush1.msra.mxu0 %v68
    %108 = vmatprep.subr.mxu0 0.0
    %109 = vmatpush1.msra.mxu0 0.0
    %110 = vmatprep.subr.mxu0 0.0
    %111 = vmatpush1.msra.mxu0 0.0
    %112 = vmatprep.subr.mxu0 0.0
    %113 = vmatpush1.msra.mxu0 0.0
    %114 = vmatprep.subr.mxu0 0.0
    %115 = vmatpush1.msra.mxu0 0.0
    %116 = vmatprep.subr.mxu0 0.0
    %117 = vmatpush1.msra.mxu0 0.0
    %118 = vmatprep.subr.mxu0 0.0
    %119 = vmatpush1.msra.mxu0 0.0
    %120 = vmatprep.subr.mxu0 0.0
    %121 = vmatpush1.msra.mxu0 0.0
    %122 = vmatprep.subr.mxu0 0.0
    %123 = vmatpush1.msra.mxu0 0.0
    %124 = vmatprep.subr.mxu0 0.0
    %125 = vmatpush1.msra.mxu0 0.0
    %126 = vmatprep.subr.mxu0 0.0
    %127 = vmatpush1.msra.mxu0 0.0
    %128 = vmatprep.subr.mxu0 0.0
    %129 = vmatpush1.msra.mxu0 0.0
    %130 = vmatprep.subr.mxu0 0.0
    %131 = vmatpush1.msra.mxu0 0.0
    %132 = vmatprep.subr.mxu0 0.0
    %133 = vmatpush1.msra.mxu0 0.0
    %134 = vmatprep.subr.mxu0 0.0
    %135 = vmatpush1.msra.mxu0 0.0
    %136 = vmatprep.subr.mxu0 0.0
    %137 = vmatpush1.msra.mxu0 0.0
    %138 = vmatprep.subr.mxu0 0.0
    %139 = vmatpush1.msra.mxu0 0.0
    %140 = vmatprep.subr.mxu0 0.0
    %141 = vmatpush1.msra.mxu0 0.0
    %142 = vmatprep.subr.mxu0 0.0
    %143 = vmatpush1.msra.mxu0 0.0
    %144 = vmatprep.subr.mxu0 0.0
    %145 = vmatpush1.msra.mxu0 0.0
    %146 = vmatprep.subr.mxu0 0.0
    %147 = vmatpush1.msra.mxu0 0.0
    %148 = vmatprep.subr.mxu0 0.0
    %149 = vmatpush1.msra.mxu0 0.0
    %150 = vmatprep.subr.mxu0 0.0
    %151 = vmatpush1.msra.mxu0 0.0
    %152 = vmatprep.subr.mxu0 0.0
    %153 = vmatpush1.msra.mxu0 0.0
    %154 = vmatprep.subr.mxu0 0.0
    %155 = vmatpush1.msra.mxu0 0.0
    %156 = vmatprep.subr.mxu0 0.0
    %157 = vmatpush1.msra.mxu0 0.0
    %158 = vmatprep.subr.mxu0 0.0
    %159 = vmatpush1.msra.mxu0 0.0
    %160 = vmatprep.subr.mxu0 0.0
    %161 = vmatpush1.msra.mxu0 0.0
    %162 = vmatprep.subr.mxu0 0.0
    %163 = vmatpush1.msra.mxu0 0.0
    %164 = vmatprep.subr.mxu0 0.0
    %165 = vmatpush1.msra.mxu0 0.0
    %166 = vmatprep.subr.mxu0 0.0
    %167 = vmatpush1.msra.mxu0 0.0
    %168 = vmatprep.subr.mxu0 0.0
    %169 = vmatpush1.msra.mxu0 0.0
    %170 = vmatprep.mubr.f32.mxu0 0.0
    %171 = vmatmul.mubr.f32.gmra.mrb[0].mxu0 %v95
    %v172 = vpop.f32.mrb[0].mxu0
    %v173 = vadd.f32 %v76, %v172
    %v174 = vpop.f32.mrb[0].mxu0
    %175 = vmatprep.mubr.f32.mxu0 0.0
    %176 = vmatmul.mubr.f32.gmra.mrb[0].mxu0 %v98
    %v177 = vpop.f32.mrb[0].mxu0
    %v178 = vadd.f32 %v81, %v177
    %v179 = vpop.f32.mrb[0].mxu0
    %180 = vmatprep.mubr.f32.mxu0 0.0
    %181 = vmatmul.mubr.f32.gmra.mrb[0].mxu0 %v101
    %v182 = vpop.f32.mrb[0].mxu0
    %v183 = vadd.f32 %v86, %v182
    %v184 = vpop.f32.mrb[0].mxu0
    %185 = vmatprep.mubr.f32.mxu0 0.0
    %186 = vmatmul.mubr.f32.gmra.mrb[0].mxu0 %v104
    %v187 = vpop.f32.mrb[0].mxu0
    %v188 = vadd.f32 %v91, %v187
    %v189 = vpop.f32.mrb[0].mxu0
    %190 = vdwg.mxu0
    %v191 = vmax.f32 %v173, 0.0
    %v192 = vmax.f32 %v178, 0.0
    %v193 = vmax.f32 %v183, 0.0
    %v194 = vmax.f32 %v188, 0.0
    %195 = vst.msk [vmem:[#allocation2] sm:$0xff] %vm54, %v191
    %196 = vst.msk [vmem:[#allocation2 + $0x8] sm:$0xff] %vm54, %v192
    %197 = vst.msk [vmem:[#allocation2 + $0x10] sm:$0xff] %vm54, %v193
    %198 = vst.msk [vmem:[#allocation2 + $0x18] sm:$0xff] %vm54, %v194
    %v199 = vld [vmem:[#allocation2] sm:$0xff]
    %v200 = vld [vmem:[#allocation2 + $0x8] sm:$0xff]
    %v201 = vld [vmem:[#allocation2 + $0x10] sm:$0xff]
    %v202 = vld [vmem:[#allocation2 + $0x18] sm:$0xff]
    %s203 = sld [smem:[#allocation3]]
    %v204 = vld [vmem:[%s7] sm:$0x3]
    %vm205 = vcmask 261120
    %v207 = vsel %vm205, %v204, 0
    %209 = vmatprep.subr.mxu0 0.0
    %210 = vmatpush1.msra.mxu0 %v199
    %211 = vmatprep.subr.mxu0 0.0
    %212 = vmatpush1.msra.mxu0 %v200
    %213 = vmatprep.subr.mxu0 0.0
    %214 = vmatpush1.msra.mxu0 %v201
    %215 = vmatprep.subr.mxu0 0.0
    %216 = vmatpush1.msra.mxu0 %v202
    %217 = vmatprep.subr.mxu0 0.0
    %218 = vmatpush1.msra.mxu0 0.0
    %219 = vmatprep.subr.mxu0 0.0
    %220 = vmatpush1.msra.mxu0 0.0
    %221 = vmatprep.subr.mxu0 0.0
    %222 = vmatpush1.msra.mxu0 0.0
    %223 = vmatprep.subr.mxu0 0.0
    %224 = vmatpush1.msra.mxu0 0.0
    %225 = vmatprep.subr.mxu0 0.0
    %226 = vmatpush1.msra.mxu0 0.0
    %227 = vmatprep.subr.mxu0 0.0
    %228 = vmatpush1.msra.mxu0 0.0
    %229 = vmatprep.subr.mxu0 0.0
    %230 = vmatpush1.msra.mxu0 0.0
    %231 = vmatprep.subr.mxu0 0.0
    %232 = vmatpush1.msra.mxu0 0.0
    %233 = vmatprep.subr.mxu0 0.0
    %234 = vmatpush1.msra.mxu0 0.0
    %235 = vmatprep.subr.mxu0 0.0
    %236 = vmatpush1.msra.mxu0 0.0
    %237 = vmatprep.subr.mxu0 0.0
    %238 = vmatpush1.msra.mxu0 0.0
    %239 = vmatprep.subr.mxu0 0.0
    %240 = vmatpush1.msra.mxu0 0.0
    %241 = vmatprep.subr.mxu0 0.0
    %242 = vmatpush1.msra.mxu0 0.0
    %243 = vmatprep.subr.mxu0 0.0
    %244 = vmatpush1.msra.mxu0 0.0
    %245 = vmatprep.subr.mxu0 0.0
    %246 = vmatpush1.msra.mxu0 0.0
    %247 = vmatprep.subr.mxu0 0.0
    %248 = vmatpush1.msra.mxu0 0.0
    %249 = vmatprep.subr.mxu0 0.0
    %250 = vmatpush1.msra.mxu0 0.0
    %251 = vmatprep.subr.mxu0 0.0
    %252 = vmatpush1.msra.mxu0 0.0
    %253 = vmatprep.subr.mxu0 0.0
    %254 = vmatpush1.msra.mxu0 0.0
    %255 = vmatprep.subr.mxu0 0.0
    %256 = vmatpush1.msra.mxu0 0.0
    %257 = vmatprep.subr.mxu0 0.0
    %258 = vmatpush1.msra.mxu0 0.0
    %259 = vmatprep.subr.mxu0 0.0
    %260 = vmatpush1.msra.mxu0 0.0
    %261 = vmatprep.subr.mxu0 0.0
    %262 = vmatpush1.msra.mxu0 0.0
    %263 = vmatprep.subr.mxu0 0.0
    %264 = vmatpush1.msra.mxu0 0.0
    %265 = vmatprep.subr.mxu0 0.0
    %266 = vmatpush1.msra.mxu0 0.0
    %267 = vmatprep.subr.mxu0 0.0
    %268 = vmatpush1.msra.mxu0 0.0
    %269 = vmatprep.subr.mxu0 0.0
    %270 = vmatpush1.msra.mxu0 0.0
    %271 = vmatprep.subr.mxu0 0.0
    %272 = vmatpush1.msra.mxu0 0.0
    %273 = vmatprep.mubr.f32.mxu0 0.0
    %274 = vmatmul.mubr.f32.gmra.mrb[0].mxu0 %v207
    %v275 = vpop.f32.mrb[0].mxu0
    %v276 = vadd.f32 0.0, %v275
    %v277 = vpop.f32.mrb[0].mxu0
    %278 = vdwg.mxu0
    %v280 = vrot.slane %v276, 1
    %282 = vxpose.xlu0.b32.start [1/16] %v280, 128
    %283 = vxpose.xlu0.b32.cont [2/16] 0.0, 128
    %284 = vxpose.xlu0.b32.cont [3/16] 0.0, 128
    %285 = vxpose.xlu0.b32.cont [4/16] 0.0, 128
    %286 = vxpose.xlu0.b32.cont [5/16] 0.0, 128
    %287 = vxpose.xlu0.b32.cont [6/16] 0.0, 128
    %288 = vxpose.xlu0.b32.cont [7/16] 0.0, 128
    %289 = vxpose.xlu0.b32.cont [8/16] 0.0, 128
    %290 = vxpose.xlu0.b32.cont [9/16] 0.0, 128
    %291 = vxpose.xlu0.b32.cont [10/16] 0.0, 128
    %292 = vxpose.xlu0.b32.cont [11/16] 0.0, 128
    %293 = vxpose.xlu0.b32.cont [12/16] 0.0, 128
    %294 = vxpose.xlu0.b32.cont [13/16] 0.0, 128
    %295 = vxpose.xlu0.b32.cont [14/16] 0.0, 128
    %296 = vxpose.xlu0.b32.cont [15/16] 0.0, 128
    %297 = vxpose.xlu0.b32.end [16/16] 0.0, 128
    %v298 = vpop.trf.xlu0
    %v299 = vpop.trf.xlu0
    %v300 = vpop.trf.xlu0
    %v301 = vpop.trf.xlu0
    %v302 = vpop.trf.xlu0
    %v303 = vpop.trf.xlu0
    %v304 = vpop.trf.xlu0
    %v305 = vpop.trf.xlu0
    %v306 = vpop.trf.xlu0
    %v307 = vpop.trf.xlu0
    %v308 = vpop.trf.xlu0
    %v309 = vpop.trf.xlu0
    %v310 = vpop.trf.xlu0
    %v311 = vpop.trf.xlu0
    %v312 = vpop.trf.xlu0
    %v313 = vpop.trf.xlu0
    %v314 = vlaneseq
    %v315 = vshrl.u32 %v314, 7
    %v316 = vsub.s32 0, %v315
    %v317 = vrot.slane %v276, %v316
    %319 = vset.pattern.permute.xlu0 0
    %320 = vperm.xlu0 %319, %v298
    %v321 = vpop.permute.xlu0 %320
    %324 = vset.pattern.permute.xlu0 0
    %325 = vperm.xlu0 %324, %v299
    %v326 = vpop.permute.xlu0 %325
    %v328 = vadd.f32 %v317, %v321
    %v329 = vadd.f32 %v317, %v326
    %v330 = vstv %s203
    %v331 = vadd.f32 %v328, %v330
    %v332 = vadd.f32 %v329, %v330
    %v333 = vtanh.pop %v331
    %v334 = vtanh.pop %v332
    %v335 = vmul.f32 %v52, %v333
    %v336 = vmul.f32 %v53, %v334
    %v337 = vsel %vm54, %v335, 0.0
    %v338 = vsel %vm54, %v336, 0.0
    %v339 = vadd.f32 %v337, %v338
    %v340 = vrot.slane %v339, 4
    %v341 = vadd.f32 %v339, %v340
    %v342 = vrot.slane %v341, 2
    %v343 = vadd.f32 %v341, %v342
    %v344 = vrot.slane %v343, 1
    %v345 = vadd.f32 %v343, %v344
    %v346 = vadd.f32 %v63, %v345
    %v347 = vmul.f32 %v346, 0.5
    %v348 = vmax.f32 %v347, 1.0
    %v349 = vrsqrt.pop %v348
    %v350 = vsub.f32 %v63, %v345
    %v351 = vmul.f32 %v350, 0.5
    %v352 = vmax.f32 %v351, 1.0
    %v353 = vrsqrt.pop %v352
    %v354 = vadd.f32 %v52, %v335
    %v355 = vadd.f32 %v53, %v336
    %v356 = vmul.f32 %v354, 0.5
    %v357 = vmul.f32 %v355, 0.5
    %v358 = vpack.c.bf16 %v357, %v356
    %v359 = vmul.f32 %v199, %v349
    %v360 = vmul.f32 %v200, %v349
    %v361 = vpack.c.bf16 %v360, %v359
    %v363 = vsel %vm54, %v361, 0
    %365 = vmatprep.subr.bf16.mxu0 0
    %366 = vmatpush1.bf16.msra.mxu0 %v358
    %367 = vmatprep.subr.bf16.mxu0 0
    %368 = vmatpush1.bf16.msra.mxu0 0
    %369 = vmatprep.subr.bf16.mxu0 0
    %370 = vmatpush1.bf16.msra.mxu0 0
    %371 = vmatprep.subr.bf16.mxu0 0
    %372 = vmatpush1.bf16.msra.mxu0 0
    %373 = vmatprep.subr.bf16.mxu0 0
    %374 = vmatpush1.bf16.msra.mxu0 0
    %375 = vmatprep.subr.bf16.mxu0 0
    %376 = vmatpush1.bf16.msra.mxu0 0
    %377 = vmatprep.subr.bf16.mxu0 0
    %378 = vmatpush1.bf16.msra.mxu0 0
    %379 = vmatprep.subr.bf16.mxu0 0
    %380 = vmatpush1.bf16.msra.mxu0 0
    %381 = vmatprep.subr.bf16.mxu0 0
    %382 = vmatpush1.bf16.msra.mxu0 0
    %383 = vmatprep.subr.bf16.mxu0 0
    %384 = vmatpush1.bf16.msra.mxu0 0
    %385 = vmatprep.subr.bf16.mxu0 0
    %386 = vmatpush1.bf16.msra.mxu0 0
    %387 = vmatprep.subr.bf16.mxu0 0
    %388 = vmatpush1.bf16.msra.mxu0 0
    %389 = vmatprep.subr.bf16.mxu0 0
    %390 = vmatpush1.bf16.msra.mxu0 0
    %391 = vmatprep.subr.bf16.mxu0 0
    %392 = vmatpush1.bf16.msra.mxu0 0
    %393 = vmatprep.subr.bf16.mxu0 0
    %394 = vmatpush1.bf16.msra.mxu0 0
    %395 = vmatprep.subr.bf16.mxu0 0
    %396 = vmatpush1.bf16.msra.mxu0 0
    %397 = vmatprep.mubr.bf16.mxu0 0
    %398 = vmatmul.mubr.bf16.gmra.mrb[0].mxu0 %v363
    %v399 = vpop.f32.mrb[0].mxu0
    %v400 = vadd.f32 0.0, %v399
    %v401 = vpop.f32.mrb[0].mxu0
    %v402 = vpop.f32.mrb[0].mxu0
    %v403 = vadd.f32 0.0, %v402
    %v404 = vpop.f32.mrb[0].mxu0
    %405 = vdwg.mxu0
    %v406 = vmul.f32 %v400, %v349
    %v407 = vmul.f32 %v403, %v349
    %v408 = vmul.f32 %v191, 0.1
    %v409 = vmul.f32 %v192, 0.1
    %v410 = vadd.f32 %v408, %v406
    %v411 = vadd.f32 %v409, %v407
    %v412 = vsub.f32 %v52, %v335
    %v413 = vsub.f32 %v53, %v336
    %v414 = vmul.f32 %v412, 0.5
    %v415 = vmul.f32 %v413, 0.5
    %v416 = vpack.c.bf16 %v415, %v414
    %v417 = vmul.f32 %v201, %v353
    %v418 = vmul.f32 %v202, %v353
    %v419 = vpack.c.bf16 %v418, %v417
    %v421 = vsel %vm54, %v419, 0
    %423 = vmatprep.subr.bf16.mxu0 0
    %424 = vmatpush1.bf16.msra.mxu0 %v416
    %425 = vmatprep.subr.bf16.mxu0 0
    %426 = vmatpush1.bf16.msra.mxu0 0
    %427 = vmatprep.subr.bf16.mxu0 0
    %428 = vmatpush1.bf16.msra.mxu0 0
    %429 = vmatprep.subr.bf16.mxu0 0
    %430 = vmatpush1.bf16.msra.mxu0 0
    %431 = vmatprep.subr.bf16.mxu0 0
    %432 = vmatpush1.bf16.msra.mxu0 0
    %433 = vmatprep.subr.bf16.mxu0 0
    %434 = vmatpush1.bf16.msra.mxu0 0
    %435 = vmatprep.subr.bf16.mxu0 0
    %436 = vmatpush1.bf16.msra.mxu0 0
    %437 = vmatprep.subr.bf16.mxu0 0
    %438 = vmatpush1.bf16.msra.mxu0 0
    %439 = vmatprep.subr.bf16.mxu0 0
    %440 = vmatpush1.bf16.msra.mxu0 0
    %441 = vmatprep.subr.bf16.mxu0 0
    %442 = vmatpush1.bf16.msra.mxu0 0
    %443 = vmatprep.subr.bf16.mxu0 0
    %444 = vmatpush1.bf16.msra.mxu0 0
    %445 = vmatprep.subr.bf16.mxu0 0
    %446 = vmatpush1.bf16.msra.mxu0 0
    %447 = vmatprep.subr.bf16.mxu0 0
    %448 = vmatpush1.bf16.msra.mxu0 0
    %449 = vmatprep.subr.bf16.mxu0 0
    %450 = vmatpush1.bf16.msra.mxu0 0
    %451 = vmatprep.subr.bf16.mxu0 0
    %452 = vmatpush1.bf16.msra.mxu0 0
    %453 = vmatprep.subr.bf16.mxu0 0
    %454 = vmatpush1.bf16.msra.mxu0 0
    %455 = vmatprep.mubr.bf16.mxu0 0
    %456 = vmatmul.mubr.bf16.gmra.mrb[0].mxu0 %v421
    %v457 = vpop.f32.mrb[0].mxu0
    %v458 = vadd.f32 0.0, %v457
    %v459 = vpop.f32.mrb[0].mxu0
    %v460 = vpop.f32.mrb[0].mxu0
    %v461 = vadd.f32 0.0, %v460
    %v462 = vpop.f32.mrb[0].mxu0
    %463 = vdwg.mxu0
    %v464 = vmul.f32 %v458, %v353
    %v465 = vmul.f32 %v461, %v353
    %v466 = vmul.f32 %v193, 0.1
    %v467 = vmul.f32 %v194, 0.1
    %v468 = vadd.f32 %v466, %v464
    %v469 = vadd.f32 %v467, %v465
    %470 = vst.msk [vmem:[#allocation2] sm:$0xff] %vm54, %v410
    %471 = vst.msk [vmem:[#allocation2 + $0x8] sm:$0xff] %vm54, %v411
    %472 = vst.msk [vmem:[#allocation2 + $0x10] sm:$0xff] %vm54, %v468
    %473 = vst.msk [vmem:[#allocation2 + $0x18] sm:$0xff] %vm54, %v469
    %v474 = vld [vmem:[#allocation2] sm:$0xff]
    %v475 = vld [vmem:[#allocation2 + $0x8] sm:$0xff]
    %v476 = vld [vmem:[#allocation2 + $0x10] sm:$0xff]
    %v477 = vld [vmem:[#allocation2 + $0x18] sm:$0xff]
    %s478 = sld [smem:[#allocation3 + $0x1]]
    %v479 = vld [vmem:[%s8] sm:$0x3]
    %v481 = vsel %vm205, %v479, 0
    %483 = vmatprep.subr.mxu0 0.0
    %484 = vmatpush1.msra.mxu0 %v474
    %485 = vmatprep.subr.mxu0 0.0
    %486 = vmatpush1.msra.mxu0 %v475
    %487 = vmatprep.subr.mxu0 0.0
    %488 = vmatpush1.msra.mxu0 %v476
    %489 = vmatprep.subr.mxu0 0.0
    %490 = vmatpush1.msra.mxu0 %v477
    %491 = vmatprep.subr.mxu0 0.0
    %492 = vmatpush1.msra.mxu0 0.0
    %493 = vmatprep.subr.mxu0 0.0
    %494 = vmatpush1.msra.mxu0 0.0
    %495 = vmatprep.subr.mxu0 0.0
    %496 = vmatpush1.msra.mxu0 0.0
    %497 = vmatprep.subr.mxu0 0.0
    %498 = vmatpush1.msra.mxu0 0.0
    %499 = vmatprep.subr.mxu0 0.0
    %500 = vmatpush1.msra.mxu0 0.0
    %501 = vmatprep.subr.mxu0 0.0
    %502 = vmatpush1.msra.mxu0 0.0
    %503 = vmatprep.subr.mxu0 0.0
    %504 = vmatpush1.msra.mxu0 0.0
    %505 = vmatprep.subr.mxu0 0.0
    %506 = vmatpush1.msra.mxu0 0.0
    %507 = vmatprep.subr.mxu0 0.0
    %508 = vmatpush1.msra.mxu0 0.0
    %509 = vmatprep.subr.mxu0 0.0
    %510 = vmatpush1.msra.mxu0 0.0
    %511 = vmatprep.subr.mxu0 0.0
    %512 = vmatpush1.msra.mxu0 0.0
    %513 = vmatprep.subr.mxu0 0.0
    %514 = vmatpush1.msra.mxu0 0.0
    %515 = vmatprep.subr.mxu0 0.0
    %516 = vmatpush1.msra.mxu0 0.0
    %517 = vmatprep.subr.mxu0 0.0
    %518 = vmatpush1.msra.mxu0 0.0
    %519 = vmatprep.subr.mxu0 0.0
    %520 = vmatpush1.msra.mxu0 0.0
    %521 = vmatprep.subr.mxu0 0.0
    %522 = vmatpush1.msra.mxu0 0.0
    %523 = vmatprep.subr.mxu0 0.0
    %524 = vmatpush1.msra.mxu0 0.0
    %525 = vmatprep.subr.mxu0 0.0
    %526 = vmatpush1.msra.mxu0 0.0
    %527 = vmatprep.subr.mxu0 0.0
    %528 = vmatpush1.msra.mxu0 0.0
    %529 = vmatprep.subr.mxu0 0.0
    %530 = vmatpush1.msra.mxu0 0.0
    %531 = vmatprep.subr.mxu0 0.0
    %532 = vmatpush1.msra.mxu0 0.0
    %533 = vmatprep.subr.mxu0 0.0
    %534 = vmatpush1.msra.mxu0 0.0
    %535 = vmatprep.subr.mxu0 0.0
    %536 = vmatpush1.msra.mxu0 0.0
    %537 = vmatprep.subr.mxu0 0.0
    %538 = vmatpush1.msra.mxu0 0.0
    %539 = vmatprep.subr.mxu0 0.0
    %540 = vmatpush1.msra.mxu0 0.0
    %541 = vmatprep.subr.mxu0 0.0
    %542 = vmatpush1.msra.mxu0 0.0
    %543 = vmatprep.subr.mxu0 0.0
    %544 = vmatpush1.msra.mxu0 0.0
    %545 = vmatprep.subr.mxu0 0.0
    %546 = vmatpush1.msra.mxu0 0.0
    %547 = vmatprep.mubr.f32.mxu0 0.0
    %548 = vmatmul.mubr.f32.gmra.mrb[0].mxu0 %v481
    %v549 = vpop.f32.mrb[0].mxu0
    %v550 = vadd.f32 0.0, %v549
    %v551 = vpop.f32.mrb[0].mxu0
    %552 = vdwg.mxu0
    %v554 = vrot.slane %v550, 1
    %556 = vxpose.xlu0.b32.start [1/16] %v554, 128
    %557 = vxpose.xlu0.b32.cont [2/16] 0.0, 128
    %558 = vxpose.xlu0.b32.cont [3/16] 0.0, 128
    %559 = vxpose.xlu0.b32.cont [4/16] 0.0, 128
    %560 = vxpose.xlu0.b32.cont [5/16] 0.0, 128
    %561 = vxpose.xlu0.b32.cont [6/16] 0.0, 128
    %562 = vxpose.xlu0.b32.cont [7/16] 0.0, 128
    %563 = vxpose.xlu0.b32.cont [8/16] 0.0, 128
    %564 = vxpose.xlu0.b32.cont [9/16] 0.0, 128
    %565 = vxpose.xlu0.b32.cont [10/16] 0.0, 128
    %566 = vxpose.xlu0.b32.cont [11/16] 0.0, 128
    %567 = vxpose.xlu0.b32.cont [12/16] 0.0, 128
    %568 = vxpose.xlu0.b32.cont [13/16] 0.0, 128
    %569 = vxpose.xlu0.b32.cont [14/16] 0.0, 128
    %570 = vxpose.xlu0.b32.cont [15/16] 0.0, 128
    %571 = vxpose.xlu0.b32.end [16/16] 0.0, 128
    %v572 = vpop.trf.xlu0
    %v573 = vpop.trf.xlu0
    %v574 = vpop.trf.xlu0
    %v575 = vpop.trf.xlu0
    %v576 = vpop.trf.xlu0
    %v577 = vpop.trf.xlu0
    %v578 = vpop.trf.xlu0
    %v579 = vpop.trf.xlu0
    %v580 = vpop.trf.xlu0
    %v581 = vpop.trf.xlu0
    %v582 = vpop.trf.xlu0
    %v583 = vpop.trf.xlu0
    %v584 = vpop.trf.xlu0
    %v585 = vpop.trf.xlu0
    %v586 = vpop.trf.xlu0
    %v587 = vpop.trf.xlu0
    %v588 = vlaneseq
    %v589 = vshrl.u32 %v588, 7
    %v590 = vsub.s32 0, %v589
    %v591 = vrot.slane %v550, %v590
    %593 = vset.pattern.permute.xlu0 0
    %594 = vperm.xlu0 %593, %v572
    %v595 = vpop.permute.xlu0 %594
    %598 = vset.pattern.permute.xlu0 0
    %599 = vperm.xlu0 %598, %v573
    %v600 = vpop.permute.xlu0 %599
    %v602 = vadd.f32 %v591, %v595
    %v603 = vadd.f32 %v591, %v600
    %v604 = vstv %s478
    %v605 = vadd.f32 %v602, %v604
    %v606 = vadd.f32 %v603, %v604
    %v607 = vtanh.pop %v605
    %v608 = vtanh.pop %v606
    %v609 = vmul.f32 %v52, %v607
    %v610 = vmul.f32 %v53, %v608
    %v611 = vsel %vm54, %v609, 0.0
    %v612 = vsel %vm54, %v610, 0.0
    %v613 = vadd.f32 %v611, %v612
    %v614 = vrot.slane %v613, 4
    %v615 = vadd.f32 %v613, %v614
    %v616 = vrot.slane %v615, 2
    %v617 = vadd.f32 %v615, %v616
    %v618 = vrot.slane %v617, 1
    %v619 = vadd.f32 %v617, %v618
    %v620 = vadd.f32 %v63, %v619
    %v621 = vmul.f32 %v620, 0.5
    %v622 = vmax.f32 %v621, 1.0
    %v623 = vrsqrt.pop %v622
    %v624 = vsub.f32 %v63, %v619
    %v625 = vmul.f32 %v624, 0.5
    %v626 = vmax.f32 %v625, 1.0
    %v627 = vrsqrt.pop %v626
    %v628 = vadd.f32 %v52, %v609
    %v629 = vadd.f32 %v53, %v610
    %v630 = vmul.f32 %v628, 0.5
    %v631 = vmul.f32 %v629, 0.5
    %v632 = vpack.c.bf16 %v631, %v630
    %v633 = vmul.f32 %v474, %v623
    %v634 = vmul.f32 %v475, %v623
    %v635 = vpack.c.bf16 %v634, %v633
    %v637 = vsel %vm54, %v635, 0
    %639 = vmatprep.subr.bf16.mxu0 0
    %640 = vmatpush1.bf16.msra.mxu0 %v632
    %641 = vmatprep.subr.bf16.mxu0 0
    %642 = vmatpush1.bf16.msra.mxu0 0
    %643 = vmatprep.subr.bf16.mxu0 0
    %644 = vmatpush1.bf16.msra.mxu0 0
    %645 = vmatprep.subr.bf16.mxu0 0
    %646 = vmatpush1.bf16.msra.mxu0 0
    %647 = vmatprep.subr.bf16.mxu0 0
    %648 = vmatpush1.bf16.msra.mxu0 0
    %649 = vmatprep.subr.bf16.mxu0 0
    %650 = vmatpush1.bf16.msra.mxu0 0
    %651 = vmatprep.subr.bf16.mxu0 0
    %652 = vmatpush1.bf16.msra.mxu0 0
    %653 = vmatprep.subr.bf16.mxu0 0
    %654 = vmatpush1.bf16.msra.mxu0 0
    %655 = vmatprep.subr.bf16.mxu0 0
    %656 = vmatpush1.bf16.msra.mxu0 0
    %657 = vmatprep.subr.bf16.mxu0 0
    %658 = vmatpush1.bf16.msra.mxu0 0
    %659 = vmatprep.subr.bf16.mxu0 0
    %660 = vmatpush1.bf16.msra.mxu0 0
    %661 = vmatprep.subr.bf16.mxu0 0
    %662 = vmatpush1.bf16.msra.mxu0 0
    %663 = vmatprep.subr.bf16.mxu0 0
    %664 = vmatpush1.bf16.msra.mxu0 0
    %665 = vmatprep.subr.bf16.mxu0 0
    %666 = vmatpush1.bf16.msra.mxu0 0
    %667 = vmatprep.subr.bf16.mxu0 0
    %668 = vmatpush1.bf16.msra.mxu0 0
    %669 = vmatprep.subr.bf16.mxu0 0
    %670 = vmatpush1.bf16.msra.mxu0 0
    %671 = vmatprep.mubr.bf16.mxu0 0
    %672 = vmatmul.mubr.bf16.gmra.mrb[0].mxu0 %v637
    %v673 = vpop.f32.mrb[0].mxu0
    %v674 = vadd.f32 0.0, %v673
    %v675 = vpop.f32.mrb[0].mxu0
    %v676 = vpop.f32.mrb[0].mxu0
    %v677 = vadd.f32 0.0, %v676
    %v678 = vpop.f32.mrb[0].mxu0
    %679 = vdwg.mxu0
    %v680 = vmul.f32 %v674, %v623
    %v681 = vmul.f32 %v677, %v623
    %v682 = vadd.f32 %v408, %v680
    %v683 = vadd.f32 %v409, %v681
    %v684 = vsub.f32 %v52, %v609
    %v685 = vsub.f32 %v53, %v610
    %v686 = vmul.f32 %v684, 0.5
    %v687 = vmul.f32 %v685, 0.5
    %v688 = vpack.c.bf16 %v687, %v686
    %v689 = vmul.f32 %v476, %v627
    %v690 = vmul.f32 %v477, %v627
    %v691 = vpack.c.bf16 %v690, %v689
    %v693 = vsel %vm54, %v691, 0
    %695 = vmatprep.subr.bf16.mxu0 0
    %696 = vmatpush1.bf16.msra.mxu0 %v688
    %697 = vmatprep.subr.bf16.mxu0 0
    %698 = vmatpush1.bf16.msra.mxu0 0
    %699 = vmatprep.subr.bf16.mxu0 0
    %700 = vmatpush1.bf16.msra.mxu0 0
    %701 = vmatprep.subr.bf16.mxu0 0
    %702 = vmatpush1.bf16.msra.mxu0 0
    %703 = vmatprep.subr.bf16.mxu0 0
    %704 = vmatpush1.bf16.msra.mxu0 0
    %705 = vmatprep.subr.bf16.mxu0 0
    %706 = vmatpush1.bf16.msra.mxu0 0
    %707 = vmatprep.subr.bf16.mxu0 0
    %708 = vmatpush1.bf16.msra.mxu0 0
    %709 = vmatprep.subr.bf16.mxu0 0
    %710 = vmatpush1.bf16.msra.mxu0 0
    %711 = vmatprep.subr.bf16.mxu0 0
    %712 = vmatpush1.bf16.msra.mxu0 0
    %713 = vmatprep.subr.bf16.mxu0 0
    %714 = vmatpush1.bf16.msra.mxu0 0
    %715 = vmatprep.subr.bf16.mxu0 0
    %716 = vmatpush1.bf16.msra.mxu0 0
    %717 = vmatprep.subr.bf16.mxu0 0
    %718 = vmatpush1.bf16.msra.mxu0 0
    %719 = vmatprep.subr.bf16.mxu0 0
    %720 = vmatpush1.bf16.msra.mxu0 0
    %721 = vmatprep.subr.bf16.mxu0 0
    %722 = vmatpush1.bf16.msra.mxu0 0
    %723 = vmatprep.subr.bf16.mxu0 0
    %724 = vmatpush1.bf16.msra.mxu0 0
    %725 = vmatprep.subr.bf16.mxu0 0
    %726 = vmatpush1.bf16.msra.mxu0 0
    %727 = vmatprep.mubr.bf16.mxu0 0
    %728 = vmatmul.mubr.bf16.gmra.mrb[0].mxu0 %v693
    %v729 = vpop.f32.mrb[0].mxu0
    %v730 = vadd.f32 0.0, %v729
    %v731 = vpop.f32.mrb[0].mxu0
    %v732 = vpop.f32.mrb[0].mxu0
    %v733 = vadd.f32 0.0, %v732
    %v734 = vpop.f32.mrb[0].mxu0
    %735 = vdwg.mxu0
    %v736 = vmul.f32 %v730, %v627
    %v737 = vmul.f32 %v733, %v627
    %v738 = vadd.f32 %v466, %v736
    %v739 = vadd.f32 %v467, %v737
    %740 = vst.msk [vmem:[#allocation2] sm:$0xff] %vm54, %v682
    %741 = vst.msk [vmem:[#allocation2 + $0x8] sm:$0xff] %vm54, %v683
    %742 = vst.msk [vmem:[#allocation2 + $0x10] sm:$0xff] %vm54, %v738
    %743 = vst.msk [vmem:[#allocation2 + $0x18] sm:$0xff] %vm54, %v739
    %v744 = vld [vmem:[#allocation2] sm:$0xff]
    %v745 = vld [vmem:[#allocation2 + $0x8] sm:$0xff]
    %v746 = vld [vmem:[#allocation2 + $0x10] sm:$0xff]
    %v747 = vld [vmem:[#allocation2 + $0x18] sm:$0xff]
    %748 = vst.msk [vmem:[%s11] sm:$0xff] %vm54, %v744
    %749 = vst.msk [vmem:[%s11 + $0x8] sm:$0xff] %vm54, %v745
    %750 = vst.msk [vmem:[%s12] sm:$0xff] %vm54, %v746
    %751 = vst.msk [vmem:[%s12 + $0x8] sm:$0xff] %vm54, %v747
    %v752 = vld [vmem:[%s4] sm:$0xf]
    %v753 = vld [vmem:[%s5] sm:$0xf]
    %755 = vset.pattern.permute.xlu0 0
    %756 = vperm.xlu0 %755, %v753
    %v757 = vpop.permute.xlu0 %756
    %v760 = vsel %vm54, %v752, 0
    %762 = vmatprep.subr.mxu0 0.0
    %763 = vmatpush1.msra.mxu0 %v744
    %764 = vmatprep.subr.mxu0 0.0
    %765 = vmatpush1.msra.mxu0 %v745
    %766 = vmatprep.subr.mxu0 0.0
    %767 = vmatpush1.msra.mxu0 0.0
    %768 = vmatprep.subr.mxu0 0.0
    %769 = vmatpush1.msra.mxu0 0.0
    %770 = vmatprep.subr.mxu0 0.0
    %771 = vmatpush1.msra.mxu0 0.0
    %772 = vmatprep.subr.mxu0 0.0
    %773 = vmatpush1.msra.mxu0 0.0
    %774 = vmatprep.subr.mxu0 0.0
    %775 = vmatpush1.msra.mxu0 0.0
    %776 = vmatprep.subr.mxu0 0.0
    %777 = vmatpush1.msra.mxu0 0.0
    %778 = vmatprep.subr.mxu0 0.0
    %779 = vmatpush1.msra.mxu0 0.0
    %780 = vmatprep.subr.mxu0 0.0
    %781 = vmatpush1.msra.mxu0 0.0
    %782 = vmatprep.subr.mxu0 0.0
    %783 = vmatpush1.msra.mxu0 0.0
    %784 = vmatprep.subr.mxu0 0.0
    %785 = vmatpush1.msra.mxu0 0.0
    %786 = vmatprep.subr.mxu0 0.0
    %787 = vmatpush1.msra.mxu0 0.0
    %788 = vmatprep.subr.mxu0 0.0
    %789 = vmatpush1.msra.mxu0 0.0
    %790 = vmatprep.subr.mxu0 0.0
    %791 = vmatpush1.msra.mxu0 0.0
    %792 = vmatprep.subr.mxu0 0.0
    %793 = vmatpush1.msra.mxu0 0.0
    %794 = vmatprep.subr.mxu0 0.0
    %795 = vmatpush1.msra.mxu0 0.0
    %796 = vmatprep.subr.mxu0 0.0
    %797 = vmatpush1.msra.mxu0 0.0
    %798 = vmatprep.subr.mxu0 0.0
    %799 = vmatpush1.msra.mxu0 0.0
    %800 = vmatprep.subr.mxu0 0.0
    %801 = vmatpush1.msra.mxu0 0.0
    %802 = vmatprep.subr.mxu0 0.0
    %803 = vmatpush1.msra.mxu0 0.0
    %804 = vmatprep.subr.mxu0 0.0
    %805 = vmatpush1.msra.mxu0 0.0
    %806 = vmatprep.subr.mxu0 0.0
    %807 = vmatpush1.msra.mxu0 0.0
    %808 = vmatprep.subr.mxu0 0.0
    %809 = vmatpush1.msra.mxu0 0.0
    %810 = vmatprep.subr.mxu0 0.0
    %811 = vmatpush1.msra.mxu0 0.0
    %812 = vmatprep.subr.mxu0 0.0
    %813 = vmatpush1.msra.mxu0 0.0
    %814 = vmatprep.subr.mxu0 0.0
    %815 = vmatpush1.msra.mxu0 0.0
    %816 = vmatprep.subr.mxu0 0.0
    %817 = vmatpush1.msra.mxu0 0.0
    %818 = vmatprep.subr.mxu0 0.0
    %819 = vmatpush1.msra.mxu0 0.0
    %820 = vmatprep.subr.mxu0 0.0
    %821 = vmatpush1.msra.mxu0 0.0
    %822 = vmatprep.subr.mxu0 0.0
    %823 = vmatpush1.msra.mxu0 0.0
    %824 = vmatprep.subr.mxu0 0.0
    %825 = vmatpush1.msra.mxu0 0.0
    %826 = vmatprep.mubr.f32.mxu0 0.0
    %827 = vmatmul.mubr.f32.gmra.mrb[0].mxu0 %v760
    %v828 = vpop.f32.mrb[0].mxu0
    %v829 = vadd.f32 %v757, %v828
    %v830 = vpop.f32.mrb[0].mxu0
    %831 = vdwg.mxu0
    %vm832 = vcmask 125952
    %833 = vst.msk [vmem:[#allocation6] sm:$0xf] %vm832, %v829
    %834 = vmatprep.subr.mxu0 0.0
    %835 = vmatpush1.msra.mxu0 %v746
    %836 = vmatprep.subr.mxu0 0.0
    %837 = vmatpush1.msra.mxu0 %v747
    %838 = vmatprep.subr.mxu0 0.0
    %839 = vmatpush1.msra.mxu0 0.0
    %840 = vmatprep.subr.mxu0 0.0
    %841 = vmatpush1.msra.mxu0 0.0
    %842 = vmatprep.subr.mxu0 0.0
    %843 = vmatpush1.msra.mxu0 0.0
    %844 = vmatprep.subr.mxu0 0.0
    %845 = vmatpush1.msra.mxu0 0.0
    %846 = vmatprep.subr.mxu0 0.0
    %847 = vmatpush1.msra.mxu0 0.0
    %848 = vmatprep.subr.mxu0 0.0
    %849 = vmatpush1.msra.mxu0 0.0
    %850 = vmatprep.subr.mxu0 0.0
    %851 = vmatpush1.msra.mxu0 0.0
    %852 = vmatprep.subr.mxu0 0.0
    %853 = vmatpush1.msra.mxu0 0.0
    %854 = vmatprep.subr.mxu0 0.0
    %855 = vmatpush1.msra.mxu0 0.0
    %856 = vmatprep.subr.mxu0 0.0
    %857 = vmatpush1.msra.mxu0 0.0
    %858 = vmatprep.subr.mxu0 0.0
    %859 = vmatpush1.msra.mxu0 0.0
    %860 = vmatprep.subr.mxu0 0.0
    %861 = vmatpush1.msra.mxu0 0.0
    %862 = vmatprep.subr.mxu0 0.0
    %863 = vmatpush1.msra.mxu0 0.0
    %864 = vmatprep.subr.mxu0 0.0
    %865 = vmatpush1.msra.mxu0 0.0
    %866 = vmatprep.subr.mxu0 0.0
    %867 = vmatpush1.msra.mxu0 0.0
    %868 = vmatprep.subr.mxu0 0.0
    %869 = vmatpush1.msra.mxu0 0.0
    %870 = vmatprep.subr.mxu0 0.0
    %871 = vmatpush1.msra.mxu0 0.0
    %872 = vmatprep.subr.mxu0 0.0
    %873 = vmatpush1.msra.mxu0 0.0
    %874 = vmatprep.subr.mxu0 0.0
    %875 = vmatpush1.msra.mxu0 0.0
    %876 = vmatprep.subr.mxu0 0.0
    %877 = vmatpush1.msra.mxu0 0.0
    %878 = vmatprep.subr.mxu0 0.0
    %879 = vmatpush1.msra.mxu0 0.0
    %880 = vmatprep.subr.mxu0 0.0
    %881 = vmatpush1.msra.mxu0 0.0
    %882 = vmatprep.subr.mxu0 0.0
    %883 = vmatpush1.msra.mxu0 0.0
    %884 = vmatprep.subr.mxu0 0.0
    %885 = vmatpush1.msra.mxu0 0.0
    %886 = vmatprep.subr.mxu0 0.0
    %887 = vmatpush1.msra.mxu0 0.0
    %888 = vmatprep.subr.mxu0 0.0
    %889 = vmatpush1.msra.mxu0 0.0
    %890 = vmatprep.subr.mxu0 0.0
    %891 = vmatpush1.msra.mxu0 0.0
    %892 = vmatprep.subr.mxu0 0.0
    %893 = vmatpush1.msra.mxu0 0.0
    %894 = vmatprep.subr.mxu0 0.0
    %895 = vmatpush1.msra.mxu0 0.0
    %896 = vmatprep.subr.mxu0 0.0
    %897 = vmatpush1.msra.mxu0 0.0
    %898 = vmatprep.mubr.f32.mxu0 0.0
    %899 = vmatmul.mubr.f32.gmra.mrb[0].mxu0 %v760
    %v900 = vpop.f32.mrb[0].mxu0
    %v901 = vadd.f32 %v757, %v900
    %v902 = vpop.f32.mrb[0].mxu0
    %903 = vdwg.mxu0
    %904 = vst.msk [vmem:[#allocation7] sm:$0xf] %vm832, %v901
    // Predicated region
    $region42: #{esgnn_forward_pallas.1} parent=1 // pred_check
      _
    $region43: #{esgnn_forward_pallas.1} parent=1 // pred_check_branch
      %906 = sbr.rel (0) target = $region45
    $region44: #{esgnn_forward_pallas.1} parent=1 // pred_region
      %s908 = ssub.s32 64, 64
      %909 = vsyncadd [#allocation4], %s908
      %s911 = sshll.u32 [#allocation6], 4
      %s912 = int_to_ptr.vmem [resolvable:$true] %s911
      %914 = dma.vmem_to_hbm [thread:$0]  %s912, 64, %s9, [#allocation4]
    $region45: #{esgnn_forward_pallas.1} parent=1 // pred_fallthru
      _
    // Predicated region
    $region46: #{esgnn_forward_pallas.1} parent=1 // pred_check
      _
    $region47: #{esgnn_forward_pallas.1} parent=1 // pred_check_branch
      %916 = sbr.rel (0) target = $region49
    $region48: #{esgnn_forward_pallas.1} parent=1 // pred_region
      %s918 = ssub.s32 64, 64
      %919 = vsyncadd [#allocation8], %s918
      %s921 = sshll.u32 [#allocation7], 4
      %s922 = int_to_ptr.vmem [resolvable:$true] %s921
      %924 = dma.vmem_to_hbm [thread:$0]  %s922, 64, %s10, [#allocation8]
    $region49: #{esgnn_forward_pallas.1} parent=1 // pred_fallthru
      _
    // Predicated region
    $region50: #{esgnn_forward_pallas.1} parent=1 // pred_check
      _
    $region51: #{esgnn_forward_pallas.1} parent=1 // pred_check_branch
      %926 = sbr.rel (0) target = $region53
    $region52: #{esgnn_forward_pallas.1} parent=1 // pred_region
      _
    $region53: #{esgnn_forward_pallas.1} parent=1 // pred_fallthru
      _
    // Predicated region
    $region54: #{esgnn_forward_pallas.1} parent=1 // pred_check
      _
    $region55: #{esgnn_forward_pallas.1} parent=1 // pred_check_branch
      %928 = sbr.rel (0) target = $region57
    $region56: #{esgnn_forward_pallas.1} parent=1 // pred_region
      _
    $region57: #{esgnn_forward_pallas.1} parent=1 // pred_fallthru
      _
    // Predicated region
    $region58: #{esgnn_forward_pallas.1} parent=1 // pred_check
      _
    $region59: #{esgnn_forward_pallas.1} parent=1 // pred_check_branch
      %930 = sbr.rel (0) target = $region61
    $region60: #{esgnn_forward_pallas.1} parent=1 // pred_region
      %931 = dma.done [#allocation4], 64
    $region61: #{esgnn_forward_pallas.1} parent=1 // pred_fallthru
      _
    // Predicated region
    $region62: #{esgnn_forward_pallas.1} parent=1 // pred_check
      _
    $region63: #{esgnn_forward_pallas.1} parent=1 // pred_check_branch
      %933 = sbr.rel (0) target = $region65
    $region64: #{esgnn_forward_pallas.1} parent=1 // pred_region
      %934 = dma.done [#allocation8], 64
    $region65: #{esgnn_forward_pallas.1} parent=1 // pred_fallthru
      _
    // Predicated region
    $region66: #{esgnn_forward_pallas.1} parent=1 // pred_check
      _
    $region67: #{esgnn_forward_pallas.1} parent=1 // pred_check_branch
      %936 = sbr.rel (0) target = $region69
    $region68: #{esgnn_forward_pallas.1} parent=1 // pred_region
      _
    $region69: #{esgnn_forward_pallas.1} parent=1 // pred_fallthru
      _
    // Predicated region
    $region70: #{esgnn_forward_pallas.1} parent=1 // pred_check
      _
    $region71: #{esgnn_forward_pallas.1} parent=1 // pred_check_branch
      %938 = sbr.rel (0) target = $region73
    $region72: #{esgnn_forward_pallas.1} parent=1 // pred_region
      _
    $region73: #{esgnn_forward_pallas.1} parent=1 // pred_fallthru
      _
    %939 = vsyncpa [#allocation4], 1
    %940 = vsyncpa [#allocation8], 1
    %941 = vsyncpa [#allocation5], 1

</llo_original>
